<compile_context>
chip_gen: v5e
topology: v5e:2x2
jax: 0.10.0
libtpu: 0.0.40
codegen_flags: <defaults>
</compile_context>

<pallas_src>
import jax
import jax.numpy as jnp
from jax.experimental import pallas as pl
from jax.experimental.pallas import tpu as pltpu

D_HIDDEN = 768    # wav2vec2-base hidden size
D_PROJ = 256      # projector output size


def _pick_bb(b):
    """Largest of (8, 4, 2, 1) that exactly divides the batch."""
    for bb in (8, 4, 2, 1):
        if b % bb == 0:
            return bb
    return 1


def _make_mean_kernel(t_total, tq, nt, nt_split, needs_mask):
    """Streaming time-mean of x per batch block.

    Grid = (nb, n_splits, nt_split); batch-block and split axes are 'parallel',
    the time axis is the 'arbitrary' reduction axis.  acc_ref holds the running
    time-sum (BB, 768) in f32; ragged / out-of-range time tiles are masked with
    an in-kernel iota compare (no host-side padding, no extra HBM pass).
    """
    inv_t = 1.0 / float(t_total)

    def kernel(x_ref, out_ref, acc_ref):
        s = pl.program_id(1)
        t = pl.program_id(2)

        @pl.when(t == 0)
        def _():
            acc_ref[...] = jnp.zeros_like(acc_ref)

        xv = x_ref[...].astype(jnp.float32)            # (BB, tq, 768), f32 accum
        if needs_mask:
            gt = s * nt_split + t                       # global time-tile index
            rem = t_total - gt * tq                     # valid frames in this tile
            fi = jax.lax.broadcasted_iota(jnp.int32, (1, tq, 1), 1)
            xv = jnp.where(fi < rem, xv, 0.0)           # zero tail / OOR frames
        acc_ref[...] += jnp.sum(xv, axis=1)             # (BB, 768)

        @pl.when(t == pl.num_programs(2) - 1)
        def _():
            # Partial time-mean for this (batch block, split); splits are summed
            # in the wrapper.
            out_ref[0] = acc_ref[...] * inv_t

    return kernel


def bayerl_head(x, w_proj, b_proj, w_cls, b_cls, *, tq=1024):
    """x: (B, T, 768) float hidden states; returns logits (B, 1) float32."""
    B, T, D = x.shape
    assert D == D_HIDDEN

    BB = _pick_bb(B)                 # batch rows per grid step
    nb = B // BB

    # Cap the time tile so the double-buffered x tile stays under ~26 MiB,
    # which fits the 32 MiB scoped-VMEM budget on every generation (v7x has
    # only 64 MiB physical VMEM; v5e's default scoped limit is raised below).
    itemsize = jnp.dtype(x.dtype).itemsize
    max_tile_bytes = 13 * 1024 * 1024
    tq_cap = max(8, max_tile_bytes // (BB * D_HIDDEN * itemsize))
    tq = int(min(tq, tq_cap))

    if T <= tq:
        tq_eff, nt = T, 1            # whole sequence in one tile
    else:
        tq_eff = max(8, (tq // 8) * 8)   # (8,128) sublane constraint on x tile
        nt = pl.cdiv(T, tq_eff)
    assert tq_eff == T or tq_eff % 8 == 0

    # When there is only a single batch block, split the time tiles into two
    # parallel partial reductions so both v7x TensorCores get streaming work.
    n_splits = 2 if (nb == 1 and nt >= 4) else 1
    nt_split = pl.cdiv(nt, n_splits)
    needs_mask = (T % tq_eff != 0) or (n_splits * nt_split != nt)

    def x_index_map(b, s, t):
        gt = s * nt_split + t
        gt = jnp.minimum(gt, nt - 1)     # never start a DMA past the array
        return (b, gt, 0)

    partial_means = pl.pallas_call(
        _make_mean_kernel(T, tq_eff, nt, nt_split, needs_mask),
        out_shape=jax.ShapeDtypeStruct((n_splits, B, D_HIDDEN), jnp.float32),
        grid_spec=pltpu.PrefetchScalarGridSpec(
            num_scalar_prefetch=0,
            grid=(nb, n_splits, nt_split),
            in_specs=[pl.BlockSpec((BB, tq_eff, D_HIDDEN), x_index_map)],
            out_specs=pl.BlockSpec((1, BB, D_HIDDEN), lambda b, s, t: (s, b, 0)),
            scratch_shapes=[pltpu.VMEM((BB, D_HIDDEN), jnp.float32)],
        ),
        compiler_params=pltpu.CompilerParams(
            dimension_semantics=("parallel", "parallel", "arbitrary"),
            vmem_limit_bytes=32 * 1024 * 1024,
        ),
    )(x)

    pooled = jnp.sum(partial_means, axis=0)      # (B, 768) time-mean, f32

    # Head is affine at inference: fold projector + classifier into one matvec.
    w_eff = w_proj @ w_cls                       # (768, 1)
    b_eff = b_proj @ w_cls + b_cls               # (1,)
    return pooled @ w_eff + b_eff                # (B, 1)


def bayerl_head_ref(x, w_proj, b_proj, w_cls, b_cls):
    h = jnp.einsum("btd,dp->btp", x.astype(jnp.float32), w_proj) + b_proj
    pooled = h.mean(axis=1)
    return pooled @ w_cls + b_cls


if __name__ == "__main__":
    key = jax.random.PRNGKey(0)
    k_x, k_wp, k_bp, k_wc, k_bc = jax.random.split(key, 5)

    B, T = 2, 16   # small shapes: batch=2, seq(time)=16, hidden=768 (fixed by model)
    x = jax.random.normal(k_x, (B, T, D_HIDDEN), jnp.float32)

    # Deterministic synthetic parameters (shapes from nn.Linear(768,256) / (256,1)).
    w_proj = jax.random.normal(k_wp, (D_HIDDEN, D_PROJ), jnp.float32) * 0.02
    b_proj = jax.random.normal(k_bp, (D_PROJ,), jnp.float32) * 0.02
    w_cls = jax.random.normal(k_wc, (D_PROJ, 1), jnp.float32) * 0.02
    b_cls = jax.random.normal(k_bc, (1,), jnp.float32) * 0.02

    # 1) Whole-sequence-per-step path (small T).
    logits = jax.block_until_ready(bayerl_head(x, w_proj, b_proj, w_cls, b_cls))
    ref = bayerl_head_ref(x, w_proj, b_proj, w_cls, b_cls)
    assert logits.shape == (B, 1)
    assert jnp.allclose(logits, ref, atol=1e-4, rtol=1e-3)

    # 2) Tiled ragged-T path: tail tile masked in-kernel, no host-side jnp.pad.
    T2 = 640
    x2 = jax.random.normal(k_x, (B, T2, D_HIDDEN), jnp.float32)
    logits2 = jax.block_until_ready(
        bayerl_head(x2, w_proj, b_proj, w_cls, b_cls, tq=256))
    ref2 = bayerl_head_ref(x2, w_proj, b_proj, w_cls, b_cls)
    assert logits2.shape == (B, 1)
    assert jnp.allclose(logits2, ref2, atol=1e-4, rtol=1e-3)

    # 3) B=1 path: time tiles split into two parallel partial reductions
    #    (megacore work even without batch parallelism), ragged tail masked.
    T3 = 1100
    x3 = jax.random.normal(k_x, (1, T3, D_HIDDEN), jnp.float32)
    logits3 = jax.block_until_ready(
        bayerl_head(x3, w_proj, b_proj, w_cls, b_cls, tq=128))
    ref3 = bayerl_head_ref(x3, w_proj, b_proj, w_cls, b_cls)
    assert logits3.shape == (1, 1)
    assert jnp.allclose(logits3, ref3, atol=1e-4, rtol=1e-3)

    # 4) bf16 hidden states (halves HBM traffic); f32 accumulation in-kernel.
    x2_bf = x2.astype(jnp.bfloat16)
    logits4 = jax.block_until_ready(
        bayerl_head(x2_bf, w_proj, b_proj, w_cls, b_cls, tq=256))
    ref4 = bayerl_head_ref(x2_bf, w_proj, b_proj, w_cls, b_cls)
    assert jnp.allclose(logits4, ref4, atol=2e-3, rtol=2e-2)

    print("KERNEL_OK")
</pallas_src>

<mosaic_0001>
module attributes {stable_mosaic.version = 11 : i64} {
  func.func @kernel(%arg0: i32, %arg1: i32, %arg2: i32, %arg3: memref<2x16x768xf32, #tpu.memory_space<vmem>>, %arg4: memref<1x2x768xf32, #tpu.memory_space<vmem>>, %arg5: memref<2x768xf32, #tpu.memory_space<vmem>>) attributes {dimension_semantics = [#tpu.dimension_semantics<parallel>, #tpu.dimension_semantics<parallel>, #tpu.dimension_semantics<arbitrary>], iteration_bounds = array<i64: 1, 1, 1>, scalar_prefetch = 0 : i64, scratch_operands = 1 : i64, tpu.core_type = #tpu.core_type<tc>, window_params = [{transform_indices = @transform_0, window_bounds = array<i64: 2, 16, 768>}, {transform_indices = @transform_1, window_bounds = array<i64: 1, 2, 768>}]} {
    %c0_i32 = arith.constant 0 : i32
    %0 = arith.cmpi eq, %arg2, %c0_i32 : i32
    %1 = arith.extui %0 : i1 to i32
    %c0_i32_0 = arith.constant 0 : i32
    %2 = arith.cmpi ne, %1, %c0_i32_0 : i32
    scf.if %2 {
      %cst_9 = arith.constant 0.000000e+00 : f32
      %11 = vector.broadcast %cst_9 : f32 to vector<2x768xf32>
      %c0_10 = arith.constant 0 : index
      %c0_11 = arith.constant 0 : index
      %12 = vector.load %arg5[%c0_10, %c0_11] : memref<2x768xf32, #tpu.memory_space<vmem>>, vector<2x768xf32>
      tpu.vector_store %arg5[%c0_10, %c0_11], %11 {strides = array<i32>} : memref<2x768xf32, #tpu.memory_space<vmem>>, vector<2x768xf32>,
    } else {
    }
    %c0 = arith.constant 0 : index
    %c0_1 = arith.constant 0 : index
    %c0_2 = arith.constant 0 : index
    %3 = vector.load %arg3[%c0, %c0_1, %c0_2] : memref<2x16x768xf32, #tpu.memory_space<vmem>>, vector<2x16x768xf32>
    %c0_3 = arith.constant 0 : index
    %c0_4 = arith.constant 0 : index
    %4 = vector.load %arg5[%c0_3, %c0_4] : memref<2x768xf32, #tpu.memory_space<vmem>>, vector<2x768xf32>
    %cst = arith.constant dense<0.000000e+00> : vector<2x768xf32>
    %5 = vector.multi_reduction <add>, %3, %cst [1] : vector<2x16x768xf32> to vector<2x768xf32>
    %6 = arith.addf %4, %5 : vector<2x768xf32>
    %c0_5 = arith.constant 0 : index
    %c0_6 = arith.constant 0 : index
    %7 = vector.load %arg5[%c0_5, %c0_6] : memref<2x768xf32, #tpu.memory_space<vmem>>, vector<2x768xf32>
    tpu.vector_store %arg5[%c0_5, %c0_6], %6 {strides = array<i32>} : memref<2x768xf32, #tpu.memory_space<vmem>>, vector<2x768xf32>,
    %c0_i32_7 = arith.constant 0 : i32
    %8 = arith.cmpi eq, %arg2, %c0_i32_7 : i32
    %9 = arith.extui %8 : i1 to i32
    %c0_i32_8 = arith.constant 0 : i32
    %10 = arith.cmpi ne, %9, %c0_i32_8 : i32
    scf.if %10 {
      %c0_9 = arith.constant 0 : index
      %c0_10 = arith.constant 0 : index
      %11 = vector.load %arg5[%c0_9, %c0_10] : memref<2x768xf32, #tpu.memory_space<vmem>>, vector<2x768xf32>
      %cst_11 = arith.constant 6.250000e-02 : f32
      %12 = vector.broadcast %cst_11 : f32 to vector<2x768xf32>
      %13 = arith.mulf %11, %12 : vector<2x768xf32>
      %c0_12 = arith.constant 0 : index
      %c0_13 = arith.constant 0 : index
      %c0_14 = arith.constant 0 : index
      %14 = vector.load %arg4[%c0_12, %c0_13, %c0_14] : memref<1x2x768xf32, #tpu.memory_space<vmem>>, vector<1x2x768xf32>
      %15 = vector.shape_cast %14 : vector<1x2x768xf32> to vector<2x768xf32>
      %16 = vector.shape_cast %13 : vector<2x768xf32> to vector<1x2x768xf32>
      tpu.vector_store %arg4[%c0_12, %c0_13, %c0_14], %16 {strides = array<i32>} : memref<1x2x768xf32, #tpu.memory_space<vmem>>, vector<1x2x768xf32>,
    } else {
    }
    return
  }
  func.func @transform_0(%arg0: i32, %arg1: i32, %arg2: i32) -> (i32, i32, i32) {
    %c1_i32 = arith.constant 1 : i32
    %0 = arith.muli %arg1, %c1_i32 : i32
    %1 = arith.addi %0, %arg2 : i32
    %c0_i32 = arith.constant 0 : i32
    %2 = arith.minsi %1, %c0_i32 : i32
    %c0_i32_0 = arith.constant 0 : i32
    %c0_i32_1 = arith.constant 0 : i32
    return %arg0, %2, %c0_i32_0 : i32, i32, i32
  }
  func.func @transform_1(%arg0: i32, %arg1: i32, %arg2: i32) -> (i32, i32, i32) {
    %c0_i32 = arith.constant 0 : i32
    %c0_i32_0 = arith.constant 0 : i32
    return %arg1, %arg0, %c0_i32 : i32, i32, i32
  }
}

</mosaic_0001>

<llo_original>
// kernel: tpu_custom_call.1
$region0: #{tpu_custom_call.1}
  #allocation0 [shape = 'u32[]', space=smem, size = 0x4, offset = 0x4, fixed_abs, tag = 'smem constant byte address 0x4 - core index']
  #allocation1 [shape = 'u32[72,128]{1,0:T(1,128)}', space=vmem, size = 0x9000, scoped, tag = 'internal scratch']
  #allocation2 [shape = 'f32[2,768]{1,0:T(2,128)}', space=vmem, size = 0x1800, scoped, tag = 'scratch operand']
  %s0 = inlined_call_operand.hbm [shape: f32[2,16,768], index: 0, kind: input, shape index: {}]
  %s1 = inlined_call_operand.hbm [shape: f32[1,2,768], index: 1, kind: output, shape index: {}]
  %s2 = sld [smem:[#allocation0]]
  $region26: #{tpu_custom_call.1} parent=0
    _
  %s4 = ssub.s32 1, %s2
  %s5 = scalar_select 0, %s4, %s2
  $region1: #{tpu_custom_call.1} parent=0
    #allocation3 [shape = 'u8[98304]{0}', space=vmem, size = 0x18000, scoped, tag = 'input window, operand 0, single buffered']
    #allocation4 [shape = 's32[1]{0}', space=sflag, size = 0x4, scoped, tag = 'scoped memory for tpu_custom_call.1']
    #allocation5 [shape = 's32[1]{0}', space=sflag, size = 0x4, scoped, tag = 'scoped memory for tpu_custom_call.1']
    #allocation6 [shape = 'u8[6144]{0}', space=vmem, size = 0x1800, scoped, tag = 'output window, operand 0, single buffered']
    %6 = vsyncpa [#allocation4], 0
    %7 = vsyncpa [#allocation5], 0
    // Predicated region
    $region2: #{tpu_custom_call.1} parent=1 // pred_check
      _
    $region3: #{tpu_custom_call.1} parent=1 // pred_check_branch
      %9 = sbr.rel (0) target = $region5
    $region4: #{tpu_custom_call.1} parent=1 // pred_region
      %s10 = sadd.s32 0, 0
      %p11 = scmp.lt.s32.totalorder %s10, 0
      %s12 = scalar_select %p11, %s10, 0
      %s13 = smul.u32 2, %s12
      %15 = vsyncadd [#allocation4], 0
      %s16 = smul.addr %s13, 6
      %s17 = smul.addr %s16, 8
      %s18 = scalar_lea.hbm %s0, %s17
      %s19 = sshll.u32 %s18, 4
      %s20 = int_to_ptr.hbm [resolvable:$true] %s19
      %s21 = sshll.u32 [#allocation3], 4
      %s22 = int_to_ptr.vmem [resolvable:$true] %s21
      %27 = dma.hbm_to_vmem [thread:$0]  %s20, 3072, %s22, [#allocation4], 768, 768, 48
    $region5: #{tpu_custom_call.1} parent=1 // pred_fallthru
      _
    // Predicated region
    $region6: #{tpu_custom_call.1} parent=1 // pred_check
      _
    $region7: #{tpu_custom_call.1} parent=1 // pred_check_branch
      %29 = sbr.rel (0) target = $region9
    $region8: #{tpu_custom_call.1} parent=1 // pred_region
      %31 = dma.done [#allocation4], 3072
    $region9: #{tpu_custom_call.1} parent=1 // pred_fallthru
      _
    %s32 = sadd.s32 0, 0
    %p33 = scmp.lt.s32.totalorder %s32, 0
    %s34 = scalar_select %p33, %s32, 0
    %s35 = smul.u32 2, %s34
    %p36 = scmp.eq.s32.totalorder 0, 0
    // Predicated region
    $region10: #{tpu_custom_call.1} parent=1 // pred_check
      %p37 = pneg %p36
    $region11: #{tpu_custom_call.1} parent=1 // pred_check_branch
      %39 = sbr.rel (%p37) target = $region13
    $region12: #{tpu_custom_call.1} parent=1 // pred_region
      %40 = vst [vmem:[#allocation2] sm:$0xff] 0.0
      %41 = vst [vmem:[#allocation2 + $0x8] sm:$0xf] 0.0
    $region13: #{tpu_custom_call.1} parent=1 // pred_fallthru
      _
    %v42 = vld [vmem:[#allocation3] sm:$0xff]
    %v43 = vld [vmem:[#allocation3 + $0x8] sm:$0xff]
    %v44 = vld [vmem:[#allocation3 + $0x10] sm:$0xff]
    %v45 = vld [vmem:[#allocation3 + $0x18] sm:$0xff]
    %v46 = vld [vmem:[#allocation3 + $0x20] sm:$0xff]
    %v47 = vld [vmem:[#allocation3 + $0x28] sm:$0xff]
    %v48 = vld [vmem:[#allocation3 + $0x30] sm:$0xff]
    %v49 = vld [vmem:[#allocation3 + $0x38] sm:$0xff]
    %v50 = vld [vmem:[#allocation3 + $0x40] sm:$0xff]
    %v51 = vld [vmem:[#allocation3 + $0x48] sm:$0xff]
    %v52 = vld [vmem:[#allocation3 + $0x50] sm:$0xff]
    %v53 = vld [vmem:[#allocation3 + $0x58] sm:$0xff]
    %v54 = vld [vmem:[#allocation3 + $0x60] sm:$0xff]
    %v55 = vld [vmem:[#allocation3 + $0x68] sm:$0xff]
    %v56 = vld [vmem:[#allocation3 + $0x70] sm:$0xff]
    %v57 = vld [vmem:[#allocation3 + $0x78] sm:$0xff]
    %v58 = vld [vmem:[#allocation3 + $0x80] sm:$0xff]
    %v59 = vld [vmem:[#allocation3 + $0x88] sm:$0xff]
    %v60 = vld [vmem:[#allocation3 + $0x90] sm:$0xff]
    %v61 = vld [vmem:[#allocation3 + $0x98] sm:$0xff]
    %v62 = vld [vmem:[#allocation3 + $0xa0] sm:$0xff]
    %v63 = vld [vmem:[#allocation3 + $0xa8] sm:$0xff]
    %v64 = vld [vmem:[#allocation3 + $0xb0] sm:$0xff]
    %v65 = vld [vmem:[#allocation3 + $0xb8] sm:$0xff]
    %v66 = vld [vmem:[#allocation2] sm:$0xff]
    %v67 = vld [vmem:[#allocation2 + $0x8] sm:$0xf]
    %v68 = vadd.f32 %v42, %v48
    %v69 = vrot.slane %v68, 4
    %v70 = vadd.f32 %v68, %v69
    %v71 = vrot.slane %v70, 2
    %v72 = vadd.f32 %v70, %v71
    %v73 = vrot.slane %v72, 1
    %v74 = vadd.f32 %v72, %v73
    %v75 = vadd.f32 %v43, %v49
    %v76 = vrot.slane %v75, 4
    %v77 = vadd.f32 %v75, %v76
    %v78 = vrot.slane %v77, 2
    %v79 = vadd.f32 %v77, %v78
    %v80 = vrot.slane %v79, 1
    %v81 = vadd.f32 %v79, %v80
    %v82 = vadd.f32 %v44, %v50
    %v83 = vrot.slane %v82, 4
    %v84 = vadd.f32 %v82, %v83
    %v85 = vrot.slane %v84, 2
    %v86 = vadd.f32 %v84, %v85
    %v87 = vrot.slane %v86, 1
    %v88 = vadd.f32 %v86, %v87
    %v89 = vadd.f32 %v45, %v51
    %v90 = vrot.slane %v89, 4
    %v91 = vadd.f32 %v89, %v90
    %v92 = vrot.slane %v91, 2
    %v93 = vadd.f32 %v91, %v92
    %v94 = vrot.slane %v93, 1
    %v95 = vadd.f32 %v93, %v94
    %v96 = vadd.f32 %v46, %v52
    %v97 = vrot.slane %v96, 4
    %v98 = vadd.f32 %v96, %v97
    %v99 = vrot.slane %v98, 2
    %v100 = vadd.f32 %v98, %v99
    %v101 = vrot.slane %v100, 1
    %v102 = vadd.f32 %v100, %v101
    %v103 = vadd.f32 %v47, %v53
    %v104 = vrot.slane %v103, 4
    %v105 = vadd.f32 %v103, %v104
    %v106 = vrot.slane %v105, 2
    %v107 = vadd.f32 %v105, %v106
    %v108 = vrot.slane %v107, 1
    %v109 = vadd.f32 %v107, %v108
    %v110 = vadd.f32 %v54, %v60
    %v111 = vrot.slane %v110, 4
    %v112 = vadd.f32 %v110, %v111
    %v113 = vrot.slane %v112, 2
    %v114 = vadd.f32 %v112, %v113
    %v115 = vrot.slane %v114, 1
    %v116 = vadd.f32 %v114, %v115
    %v117 = vadd.f32 %v55, %v61
    %v118 = vrot.slane %v117, 4
    %v119 = vadd.f32 %v117, %v118
    %v120 = vrot.slane %v119, 2
    %v121 = vadd.f32 %v119, %v120
    %v122 = vrot.slane %v121, 1
    %v123 = vadd.f32 %v121, %v122
    %v124 = vadd.f32 %v56, %v62
    %v125 = vrot.slane %v124, 4
    %v126 = vadd.f32 %v124, %v125
    %v127 = vrot.slane %v126, 2
    %v128 = vadd.f32 %v126, %v127
    %v129 = vrot.slane %v128, 1
    %v130 = vadd.f32 %v128, %v129
    %v131 = vadd.f32 %v57, %v63
    %v132 = vrot.slane %v131, 4
    %v133 = vadd.f32 %v131, %v132
    %v134 = vrot.slane %v133, 2
    %v135 = vadd.f32 %v133, %v134
    %v136 = vrot.slane %v135, 1
    %v137 = vadd.f32 %v135, %v136
    %v138 = vadd.f32 %v58, %v64
    %v139 = vrot.slane %v138, 4
    %v140 = vadd.f32 %v138, %v139
    %v141 = vrot.slane %v140, 2
    %v142 = vadd.f32 %v140, %v141
    %v143 = vrot.slane %v142, 1
    %v144 = vadd.f32 %v142, %v143
    %v145 = vadd.f32 %v59, %v65
    %v146 = vrot.slane %v145, 4
    %v147 = vadd.f32 %v145, %v146
    %v148 = vrot.slane %v147, 2
    %v149 = vadd.f32 %v147, %v148
    %v150 = vrot.slane %v149, 1
    %v151 = vadd.f32 %v149, %v150
    %v164 = vrot.slane %v81, 6
    %v165 = vrot.slane %v88, 4
    %v166 = vrot.slane %v95, 2
    %v167 = vrot.slane %v109, 6
    %v168 = vrot.slane %v123, 6
    %v169 = vrot.slane %v130, 4
    %v170 = vrot.slane %v137, 2
    %v171 = vrot.slane %v151, 6
    %vm172 = vcmask 1041408
    %v173 = vsel %vm172, %v74, %v164
    %vm174 = vcmask 1045508
    %v175 = vsel %vm174, %v165, %v166
    %vm176 = vcmask 1043456
    %v177 = vsel %vm176, %v173, %v175
    %v178 = vsel %vm172, %v102, %v167
    %v179 = vsel %vm172, %v116, %v168
    %v180 = vsel %vm174, %v169, %v170
    %v181 = vsel %vm176, %v179, %v180
    %v182 = vsel %vm172, %v144, %v171
    %vm183 = vcmask 1044484
    %v184 = vsel %vm183, %v177, %v177
    %vm185 = vcmask 1046534
    %v186 = vsel %vm185, %v177, %v184
    %v187 = vrot.slane %v181, 7
    %vm188 = vcmask 1041409
    %v189 = vsel %vm188, %v187, %v186
    %vm190 = vcmask 1043459
    %v191 = vsel %vm190, %v187, %v189
    %vm192 = vcmask 1045509
    %v193 = vsel %vm192, %v187, %v191
    %vm194 = vcmask 1047559
    %v195 = vsel %vm194, %v187, %v193
    %v196 = vsel %vm183, %v178, %v178
    %v197 = vsel %vm185, %v178, %v196
    %v198 = vrot.slane %v182, 7
    %v199 = vsel %vm188, %v198, %v197
    %v200 = vsel %vm190, %v198, %v199
    %v201 = vsel %vm192, %v198, %v200
    %v202 = vsel %vm194, %v198, %v201
    %v205 = vadd.f32 %v66, %v195
    %v206 = vadd.f32 %v67, %v202
    %207 = vst [vmem:[#allocation2] sm:$0xff] %v205
    %208 = vst [vmem:[#allocation2 + $0x8] sm:$0xf] %v206
    // Predicated region
    $region14: #{tpu_custom_call.1} parent=1 // pred_check
      %p209 = pneg %p36
    $region15: #{tpu_custom_call.1} parent=1 // pred_check_branch
      %211 = sbr.rel (%p209) target = $region17
    $region16: #{tpu_custom_call.1} parent=1 // pred_region
      %v212 = vld [vmem:[#allocation2] sm:$0xff]
      %v213 = vld [vmem:[#allocation2 + $0x8] sm:$0xf]
      %v214 = vmul.f32 %v212, 0.0625
      %v215 = vmul.f32 %v213, 0.0625
      %216 = vst [vmem:[#allocation6] sm:$0xff] %v214
      %217 = vst [vmem:[#allocation6 + $0x8] sm:$0xf] %v215
    $region17: #{tpu_custom_call.1} parent=1 // pred_fallthru
      _
    // Predicated region
    $region18: #{tpu_custom_call.1} parent=1 // pred_check
      _
    $region19: #{tpu_custom_call.1} parent=1 // pred_check_branch
      %219 = sbr.rel (0) target = $region21
    $region20: #{tpu_custom_call.1} parent=1 // pred_region
      %221 = vsyncadd [#allocation5], 0
      %s223 = sshll.u32 [#allocation6], 4
      %s224 = int_to_ptr.vmem [resolvable:$true] %s223
      %s225 = sshll.u32 %s1, 4
      %s226 = int_to_ptr.hbm [resolvable:$true] %s225
      %228 = dma.vmem_to_hbm [thread:$0]  %s224, 192, %s226, [#allocation5]
    $region21: #{tpu_custom_call.1} parent=1 // pred_fallthru
      _
    // Predicated region
    $region22: #{tpu_custom_call.1} parent=1 // pred_check
      _
    $region23: #{tpu_custom_call.1} parent=1 // pred_check_branch
      %230 = sbr.rel (0) target = $region25
    $region24: #{tpu_custom_call.1} parent=1 // pred_region
      %232 = dma.done [#allocation5], 192
    $region25: #{tpu_custom_call.1} parent=1 // pred_fallthru
      _
    %233 = vsyncpa [#allocation4], 1
    %234 = vsyncpa [#allocation5], 1

</llo_original>
